<compile_context>
chip_gen: v6e
topology: v6e:2x2x1
jax: 0.10.0
libtpu: 0.0.40
codegen_flags: <defaults>
</compile_context>

<pallas_src>
import jax
import jax.numpy as jnp
from jax import lax
from jax.experimental import pallas as pl
from jax.experimental.pallas import tpu as pltpu


# ----------------------------------------------------------------------------
# Pallas kernel: fused positional-encoding add (dropout p=0 -> identity)
# ----------------------------------------------------------------------------
def _posenc_add_kernel(x_ref, p_ref, o_ref):
    # x_ref: (tb, tsh) tile of the (B, S*H) input slab
    # p_ref: (1,  tsh) positional chunk, broadcast over the tb batch rows
    o_ref[...] = x_ref[...] + p_ref[...]
    # TODO(synk): training-mode dropout (p > 0) would need in-kernel RNG
    # (pltpu.prng_seed / pltpu.prng_random_bits with a per-block seed offset)
    # plus the 1/(1-p) rescale; p = 0.0 makes dropout the identity.


# ----------------------------------------------------------------------------
# Byte-budget tile chooser
# ----------------------------------------------------------------------------
_BLOCK_BYTES = 4 * 1024 * 1024  # ~4 MiB X blocks: measured 85%+ HBM roofline regime


def _choose_tiles(B, SH, itemsize, block_bytes=_BLOCK_BYTES):
    """Pick (tb, tsh) so one X block is ~block_bytes.

    tb: full B for tiny batches, else a multiple of 8 (ragged last block is
        masked by Pallas via a cdiv grid).
    tsh: multiple of 128 that evenly divides SH (full extent if SH is not
        128-aligned), maximized first so HBM reads stay long and contiguous.
    """
    tb = B if B < 8 else 8
    if SH % 128 != 0:
        tsh = SH                                          # full-extent lane block
    else:
        cap = max(128, (block_bytes // (tb * itemsize)) // 128 * 128)
        tsh = min(SH, cap)
        while SH % tsh != 0:                              # keep lane blocks even
            tsh -= 128
    if B >= 8:                                            # grow batch tile into budget
        cap = max(8, (block_bytes // (tsh * itemsize)) // 8 * 8)
        tb = min((B // 8) * 8, cap)
    return tb, tsh


# ----------------------------------------------------------------------------
# Wrapper
# ----------------------------------------------------------------------------
def positional_encoding_forward(X, P, dropout_p=0.0):
    """X: (B, S, H), P: (max_len, H) -> (B, S, H). Dropout identity (p=0)."""
    assert dropout_p == 0.0, "dropout is identity only for p=0.0 (eval/test path)"
    B, S, H = X.shape
    max_len, PH = P.shape
    assert PH == H, f"P hidden dim {PH} != X hidden dim {H}"
    assert S <= max_len, f"sequence length {S} exceeds max_len {max_len}"
    SH = S * H

    # Layout plumbing outside the kernel: lane-dense (B, S*H) slabs.
    x2 = X.reshape(B, SH)
    p2 = lax.slice(P, (0, 0), (S, H)).reshape(1, SH).astype(X.dtype)

    itemsize = jnp.dtype(X.dtype).itemsize
    tb, tsh = _choose_tiles(B, SH, itemsize)
    # Feature chunks on the OUTER axis, batch chunks INNER: P's block index only
    # depends on the outer axis, so it is not re-fetched every inner step.
    grid = (pl.cdiv(SH, tsh), pl.cdiv(B, tb))

    out2 = pl.pallas_call(
        _posenc_add_kernel,
        out_shape=jax.ShapeDtypeStruct((B, SH), X.dtype),
        grid=grid,
        in_specs=[
            pl.BlockSpec((tb, tsh), lambda j, i: (i, j)),   # X tile streams per step
            pl.BlockSpec((1, tsh), lambda j, i: (0, j)),    # P chunk, outer-axis only
        ],
        out_specs=pl.BlockSpec((tb, tsh), lambda j, i: (i, j)),
        input_output_aliases={0: 0},                        # write back into the X slab
        compiler_params=pltpu.CompilerParams(
            dimension_semantics=("parallel", "parallel"),
            vmem_limit_bytes=32 * 1024 * 1024),
    )(x2, p2)
    return out2.reshape(B, S, H)


# ----------------------------------------------------------------------------
# Positional table (mirrors PositionalEncoding.__init__)
# ----------------------------------------------------------------------------
def build_positional_table(max_len, num_hiddens):
    assert num_hiddens % 2 == 0, "PositionalEncoding requires even num_hiddens"
    pos = jnp.arange(max_len, dtype=jnp.float32)[:, None]                 # (L, 1)
    freq = jnp.power(
        jnp.float32(10000.0),
        jnp.arange(0, num_hiddens, 2, dtype=jnp.float32) / num_hiddens)   # (H/2,)
    ang = pos / freq                                                      # (L, H/2)
    P = jnp.zeros((max_len, num_hiddens), jnp.float32)
    P = P.at[:, 0::2].set(jnp.sin(ang))
    P = P.at[:, 1::2].set(jnp.cos(ang))
    return P


# ----------------------------------------------------------------------------
if __name__ == "__main__":
    batch, seq, num_hiddens = 2, 8, 32
    max_len, dropout_p = 1000, 0.0

    key = jax.random.PRNGKey(0)
    X = jax.random.normal(key, (batch, seq, num_hiddens), jnp.float32)
    P = build_positional_table(max_len, num_hiddens)

    # Pure-JAX reference for correctness (dropout p=0 -> identity).
    ref = X + P[None, :seq, :]

    fwd = jax.jit(positional_encoding_forward)
    out = jax.block_until_ready(fwd(X, P))

    assert out.shape == (batch, seq, num_hiddens)
    assert jnp.all(jnp.isfinite(out))
    assert jnp.allclose(out, ref, atol=1e-6, rtol=1e-6)
    print("KERNEL_OK")
</pallas_src>

<mosaic_0001>
module attributes {stable_mosaic.version = 11 : i64} {
  func.func @_posenc_add_kernel(%arg0: i32, %arg1: i32, %arg2: memref<2x256xf32, #tpu.memory_space<vmem>>, %arg3: memref<1x256xf32, #tpu.memory_space<vmem>>, %arg4: memref<2x256xf32, #tpu.memory_space<vmem>>) attributes {dimension_semantics = [#tpu.dimension_semantics<parallel>, #tpu.dimension_semantics<parallel>], iteration_bounds = array<i64: 1, 1>, scalar_prefetch = 0 : i64, scratch_operands = 0 : i64, tpu.core_type = #tpu.core_type<tc>, window_params = [{transform_indices = @transform_0, window_bounds = array<i64: 2, 256>}, {transform_indices = @transform_1, window_bounds = array<i64: 1, 256>}, {transform_indices = @transform_2, window_bounds = array<i64: 2, 256>}]} {
    %c0 = arith.constant 0 : index
    %c0_0 = arith.constant 0 : index
    %0 = vector.load %arg2[%c0, %c0_0] : memref<2x256xf32, #tpu.memory_space<vmem>>, vector<2x256xf32>
    %c0_1 = arith.constant 0 : index
    %c0_2 = arith.constant 0 : index
    %1 = vector.load %arg3[%c0_1, %c0_2] : memref<1x256xf32, #tpu.memory_space<vmem>>, vector<1x256xf32>
    %2 = vector.broadcast %1 : vector<1x256xf32> to vector<2x256xf32>
    %3 = arith.addf %0, %2 : vector<2x256xf32>
    %c0_3 = arith.constant 0 : index
    %c0_4 = arith.constant 0 : index
    %4 = vector.load %arg4[%c0_3, %c0_4] : memref<2x256xf32, #tpu.memory_space<vmem>>, vector<2x256xf32>
    tpu.vector_store %arg4[%c0_3, %c0_4], %3 {strides = array<i32>} : memref<2x256xf32, #tpu.memory_space<vmem>>, vector<2x256xf32>,
    return
  }
  func.func @transform_0(%arg0: i32, %arg1: i32) -> (i32, i32) {
    %c0_i32 = arith.constant 0 : i32
    return %arg1, %arg0 : i32, i32
  }
  func.func @transform_1(%arg0: i32, %arg1: i32) -> (i32, i32) {
    %c0_i32 = arith.constant 0 : i32
    %c0_i32_0 = arith.constant 0 : i32
    return %c0_i32, %arg0 : i32, i32
  }
  func.func @transform_2(%arg0: i32, %arg1: i32) -> (i32, i32) {
    %c0_i32 = arith.constant 0 : i32
    return %arg1, %arg0 : i32, i32
  }
}

</mosaic_0001>

<llo_original>
// kernel: positional_encoding_forward.1
$region0: #{positional_encoding_forward.1}
  #allocation0 [shape = 'u32[]', space=smem, size = 0x4, offset = 0x4, fixed_abs, tag = 'smem constant byte address 0x4 - core index']
  #allocation1 [shape = 'u32[144,128]{1,0:T(1,128)}', space=vmem, size = 0x12000, scoped, tag = 'internal scratch']
  %s0 = inlined_call_operand.vmem [shape: f32[2,256], index: 0, kind: input, shape index: {}, may-alias: {0,2}]
  %s1 = inlined_call_operand.vmem [shape: f32[1,256], index: 1, kind: input, shape index: {}]
  %s2 = inlined_call_operand.vmem [shape: f32[2,256], index: 2, kind: output, shape index: {}, may-alias: {0,2}]
  %s3 = sld [smem:[#allocation0]]
  $region18: #{positional_encoding_forward.1} parent=0
    _
  %s5 = ssub.s32 1, %s3
  %s6 = scalar_select 0, %s5, %s3
  // Predicated region
  $region2: #{positional_encoding_forward.1} parent=0 // pred_check
    _
  $region3: #{positional_encoding_forward.1} parent=0 // pred_check_branch
    %8 = sbr.rel (0) target = $region5
  $region4: #{positional_encoding_forward.1} parent=0 // pred_region
    _
  $region5: #{positional_encoding_forward.1} parent=0 // pred_fallthru
    _
  // Predicated region
  $region6: #{positional_encoding_forward.1} parent=0 // pred_check
    _
  $region7: #{positional_encoding_forward.1} parent=0 // pred_check_branch
    %10 = sbr.rel (0) target = $region9
  $region8: #{positional_encoding_forward.1} parent=0 // pred_region
    _
  $region9: #{positional_encoding_forward.1} parent=0 // pred_fallthru
    _
  %v11 = vld [vmem:[%s0] sm:$0xf]
  %v12 = vld [vmem:[%s1] sm:$0x3]
  %v14 = vlaneseq
  %v15 = vshrl.u32 %v14, 7
  %v16 = vsub.s32 0, %v15
  %v17 = vrot.slane %v12, %v16
  %v18 = vlaneseq
  %v19 = vshrl.u32 %v18, 7
  %v20 = vsub.s32 1, %v19
  %v21 = vrot.slane %v12, %v20
  %v22 = vcombine.low %v17, %v21
  %v24 = vunpack.c.l.s4 1983009808
  %v25 = vunpack.c.0.s8 %v24
  %v26 = vlaneseq
  %v27 = vshrl.u32 %v26, 7
  %v28 = vsub.s32 %v25, %v27
  %v29 = vrot.slane %v22, %v28
  %v31 = vadd.f32 %v11, %v29
  %32 = vst [vmem:[%s2] sm:$0xf] %v31
  // Predicated region
  $region10: #{positional_encoding_forward.1} parent=0 // pred_check
    _
  $region11: #{positional_encoding_forward.1} parent=0 // pred_check_branch
    %34 = sbr.rel (0) target = $region13
  $region12: #{positional_encoding_forward.1} parent=0 // pred_region
    _
  $region13: #{positional_encoding_forward.1} parent=0 // pred_fallthru
    _
  // Predicated region
  $region14: #{positional_encoding_forward.1} parent=0 // pred_check
    _
  $region15: #{positional_encoding_forward.1} parent=0 // pred_check_branch
    %36 = sbr.rel (0) target = $region17
  $region16: #{positional_encoding_forward.1} parent=0 // pred_region
    _
  $region17: #{positional_encoding_forward.1} parent=0 // pred_fallthru
    _

</llo_original>
